<compile_context>
chip_gen: v6e
topology: v6e:2x2x1
jax: 0.10.0
libtpu: 0.0.40
codegen_flags: <defaults>
</compile_context>

<pallas_src>
import math
from functools import partial

import jax
import jax.numpy as jnp
from jax.experimental import pallas as pl
from jax.experimental.pallas import tpu as pltpu


def _gcn_kernel(*refs, alpha, theta, variant, residual):
    """Grid = (row tiles [parallel], K tiles over adj columns [arbitrary])."""
    idx = 0
    adj_ref = refs[idx]; idx += 1
    x_ref = refs[idx]; idx += 1
    h0_ref = refs[idx]; idx += 1
    if variant:
        w_hi_ref, w_h0_ref = refs[idx], refs[idx + 1]; idx += 2
    else:
        w_ref = refs[idx]; idx += 1
    if residual:
        xres_ref = refs[idx]; idx += 1
    else:
        xres_ref = None
    out_ref, acc_ref = refs[idx], refs[idx + 1]

    k = pl.program_id(1)

    @pl.when(k == 0)
    def _init():
        acc_ref[...] = jnp.zeros_like(acc_ref)

    # hi accumulation: (tn, tk) adj tile @ (tk, F) input tile on the MXU,
    # f32 accumulation regardless of (possibly bf16) operand dtype.
    acc_ref[...] += jnp.dot(adj_ref[...], x_ref[...],
                            preferred_element_type=jnp.float32)

    @pl.when(k == pl.num_programs(1) - 1)
    def _finalize():
        hi = acc_ref[...]                                   # (tn, F) f32
        h0_f32 = h0_ref[...].astype(jnp.float32)
        r = (1.0 - alpha) * hi + alpha * h0_f32             # (tn, F) f32
        if variant:
            # support = concat([hi, h0], 1); support @ W == hi @ W_hi + h0 @ W_h0.
            # Weights arrive pre-split (no in-kernel ref slicing) in bf16 so
            # the finalize dots run at full MXU rate with f32 accumulation.
            sw = (jnp.dot(hi.astype(w_hi_ref.dtype), w_hi_ref[...],
                          preferred_element_type=jnp.float32)
                  + jnp.dot(h0_ref[...].astype(w_h0_ref.dtype), w_h0_ref[...],
                            preferred_element_type=jnp.float32))
        else:
            # support == r
            sw = jnp.dot(r.astype(w_ref.dtype), w_ref[...],
                         preferred_element_type=jnp.float32)
        out = theta * sw + (1.0 - theta) * r
        if residual:
            out = out + xres_ref[...].astype(jnp.float32)
        out_ref[...] = out.astype(out_ref.dtype)


def _auto_tn(N):
    # Largest of {256,128,...,8} that divides N while keeping >= 2 row tiles
    # (keeps both v7x TensorCores busy via the "parallel" row axis).
    for c in (256, 128, 64, 32, 16, 8):
        if N % c == 0 and N // c >= 2:
            return c
    return N


def _auto_tk(N, tn, F, elem_bytes, budget_bytes):
    # Grow the K tile until adj + input double buffers hit the VMEM budget.
    per_col = 2 * tn * elem_bytes + 2 * F * elem_bytes
    cap = 8192 if elem_bytes <= 2 else 4096      # v7x-safe caps from review
    max_tk = min(int(budget_bytes // per_col), cap, N)
    c = (max_tk // 128) * 128                    # lane dim must be %128 (or full)
    while c >= 128:
        if N % c == 0:
            return c
        c -= 128
    return N                                     # fall back to full-K block


def graph_convolution(inp, adj, h0, weight, lamda, alpha, l,
                      *, variant=False, residual=False,
                      tn=None, tk=None,
                      matmul_dtype=jnp.bfloat16,
                      vmem_budget_bytes=36 * 1024 * 1024):
    """Fused GCNII layer.

    adj is consumed in whatever dtype the caller stored it (bf16 recommended —
    cast once, reuse across layers; the wrapper never re-casts the N^2 array).
    The spmm runs at adj.dtype with f32 MXU accumulation; the small finalize
    matmuls run in `matmul_dtype` (bf16) with f32 accumulation.

    Grid: (rows N//tn [parallel], K-reduction N//tk [arbitrary]).  Per step a
    (tn,tk) adj tile, a (tk,F) input tile, (tn,F) h0 tile and the weight live
    in VMEM; hi is accumulated in an f32 VMEM scratch.
    """
    N, F = inp.shape
    F_in, F_out = weight.shape
    assert h0.shape == (N, F), "h0 must match input's (N, F)"
    assert F_in == (2 * F if variant else F), "weight rows must match in_features"
    if residual:
        assert F_out == F, "residual add requires out_features == in_features"

    elem_bytes = jnp.dtype(adj.dtype).itemsize
    if tn is None:
        tn = _auto_tn(N)
    if tk is None:
        tk = _auto_tk(N, tn, F, elem_bytes, vmem_budget_bytes)
    # TODO(synk): N not divisible by the tile sizes needs padding / ragged tiles.
    assert N % tn == 0 and N % tk == 0, "N must be divisible by tn and tk"
    assert tn % 8 == 0 or tn == N, "tn must be a multiple of 8 (or full N)"
    assert tk % 128 == 0 or tk == N, "tk must be a multiple of 128 (or full N)"

    theta = min(1.0, math.log(lamda / l + 1.0))  # python scalar, baked in

    # Only the small (N, F) input is cast to the spmm dtype; adj is NOT cast.
    x_spmm = inp if inp.dtype == adj.dtype else inp.astype(adj.dtype)

    kernel = partial(_gcn_kernel, alpha=float(alpha), theta=float(theta),
                     variant=variant, residual=residual)

    in_specs = [
        pl.BlockSpec((tn, tk), lambda i, k: (i, k)),        # adj tile
        pl.BlockSpec((tk, F), lambda i, k: (k, 0)),         # input K-tile
        pl.BlockSpec((tn, F), lambda i, k: (i, 0)),         # h0 row tile
    ]
    args = [adj, x_spmm, h0]

    if variant:
        w_hi = weight[:F, :].astype(matmul_dtype)           # tiny, cast once
        w_h0 = weight[F:, :].astype(matmul_dtype)
        in_specs += [pl.BlockSpec((F, F_out), lambda i, k: (0, 0)),
                     pl.BlockSpec((F, F_out), lambda i, k: (0, 0))]
        args += [w_hi, w_h0]
    else:
        in_specs.append(pl.BlockSpec((F_in, F_out), lambda i, k: (0, 0)))
        args.append(weight.astype(matmul_dtype))

    if residual:
        # Dedicated row-tile of the (original-dtype) input for the residual add.
        in_specs.append(pl.BlockSpec((tn, F), lambda i, k: (i, 0)))
        args.append(inp)

    return pl.pallas_call(
        kernel,
        out_shape=jax.ShapeDtypeStruct((N, F_out), inp.dtype),
        grid_spec=pltpu.PrefetchScalarGridSpec(
            num_scalar_prefetch=0,
            grid=(N // tn, N // tk),
            in_specs=in_specs,
            out_specs=pl.BlockSpec((tn, F_out), lambda i, k: (i, 0)),
            scratch_shapes=[pltpu.VMEM((tn, F), jnp.float32)],   # hi accumulator
        ),
        compiler_params=pltpu.CompilerParams(
            dimension_semantics=("parallel", "arbitrary"),
            vmem_limit_bytes=48 * 1024 * 1024),
    )(*args)


def reference(inp, adj, h0, weight, lamda, alpha, l,
              *, variant, residual, matmul_dtype=jnp.bfloat16):
    """Pure-JAX reference mirroring the kernel's dtype handling."""
    theta = min(1.0, math.log(lamda / l + 1.0))
    x_spmm = inp.astype(adj.dtype)
    hi = jnp.dot(adj, x_spmm, preferred_element_type=jnp.float32)
    h0_f32 = h0.astype(jnp.float32)
    r = (1.0 - alpha) * hi + alpha * h0_f32
    F = inp.shape[1]
    w = weight.astype(matmul_dtype)
    if variant:
        sw = (jnp.dot(hi.astype(matmul_dtype), w[:F, :],
                      preferred_element_type=jnp.float32)
              + jnp.dot(h0.astype(matmul_dtype), w[F:, :],
                        preferred_element_type=jnp.float32))
    else:
        sw = jnp.dot(r.astype(matmul_dtype), w,
                     preferred_element_type=jnp.float32)
    out = theta * sw + (1.0 - theta) * r
    if residual:
        out = out + inp.astype(jnp.float32)
    return out.astype(inp.dtype)


if __name__ == "__main__":
    # Small, tile-friendly shapes: N nodes, F features, F_out = F.
    N, F = 256, 128
    F_out = 128
    lamda, alpha, l = 0.5, 0.1, 1

    key = jax.random.PRNGKey(0)
    k_adj, k_x, k_h0, k_w1, k_w2 = jax.random.split(key, 5)

    # Row-normalized dense "adjacency" (stands in for torch.spmm's sparse adj).
    # TODO(synk): torch.spmm uses a sparse adjacency; here adj is densified.
    adj_raw = jax.random.uniform(k_adj, (N, N), dtype=jnp.float32)
    adj_f32 = adj_raw / jnp.sum(adj_raw, axis=1, keepdims=True)
    # Store adj once in bf16 (the recommended, reused-across-layers form); the
    # wrapper never casts adj, so this N^2-sized convert happens exactly once.
    adj_bf16 = adj_f32.astype(jnp.bfloat16)

    x = jax.random.normal(k_x, (N, F), dtype=jnp.float32)
    h0 = jax.random.normal(k_h0, (N, F), dtype=jnp.float32)

    # Deterministic weight init mirroring reset_parameters():
    # uniform(-stdv, stdv) with stdv = 1/sqrt(out_features)
    stdv = 1.0 / math.sqrt(F_out)
    w_plain = jax.random.uniform(k_w1, (F, F_out), jnp.float32, -stdv, stdv)
    w_variant = jax.random.uniform(k_w2, (2 * F, F_out), jnp.float32, -stdv, stdv)

    # Config A: f32 adj (no-cast path), variant=False, residual=False.
    # tk forced to 128 so the multi-step K-axis accumulator path (grid=(2,2))
    # is exercised on these small shapes.
    out_a = graph_convolution(x, adj_f32, h0, w_plain, lamda, alpha, l,
                              variant=False, residual=False, tk=128)
    out_a = jax.block_until_ready(out_a)
    ref_a = reference(x, adj_f32, h0, w_plain, lamda, alpha, l,
                      variant=False, residual=False)
    assert out_a.shape == (N, F_out)
    assert jnp.allclose(out_a, ref_a, atol=5e-3, rtol=5e-3)

    # Config B: bf16 adj stored once and reused (bandwidth-optimal default),
    # variant=True, residual=True, fully auto-derived tiles.
    out_b = graph_convolution(x, adj_bf16, h0, w_variant, lamda, alpha, l,
                              variant=True, residual=True)
    out_b = jax.block_until_ready(out_b)
    ref_b = reference(x, adj_bf16, h0, w_variant, lamda, alpha, l,
                      variant=True, residual=True)
    assert out_b.shape == (N, F_out)
    assert jnp.allclose(out_b, ref_b, atol=5e-3, rtol=5e-3)

    print("KERNEL_OK")
</pallas_src>

<mosaic_0001>
module attributes {stable_mosaic.version = 11 : i64} {
  func.func @_gcn_kernel(%arg0: i32, %arg1: i32, %arg2: memref<128x128xf32, #tpu.memory_space<vmem>>, %arg3: memref<128x128xf32, #tpu.memory_space<vmem>>, %arg4: memref<128x128xf32, #tpu.memory_space<vmem>>, %arg5: memref<128x128xbf16, #tpu.memory_space<vmem>>, %arg6: memref<128x128xf32, #tpu.memory_space<vmem>>, %arg7: memref<128x128xf32, #tpu.memory_space<vmem>>) attributes {dimension_semantics = [#tpu.dimension_semantics<parallel>, #tpu.dimension_semantics<arbitrary>], iteration_bounds = array<i64: 2, 2>, scalar_prefetch = 0 : i64, scratch_operands = 1 : i64, tpu.core_type = #tpu.core_type<tc>, window_params = [{transform_indices = @transform_0, window_bounds = array<i64: 128, 128>}, {transform_indices = @transform_1, window_bounds = array<i64: 128, 128>}, {transform_indices = @transform_2, window_bounds = array<i64: 128, 128>}, {pipeline_mode = #tpu.pipeline_mode<synchronous>, transform_indices = @transform_3, window_bounds = array<i64: 128, 128>}, {transform_indices = @transform_4, window_bounds = array<i64: 128, 128>}]} {
    %c0_i32 = arith.constant 0 : i32
    %0 = arith.cmpi eq, %arg1, %c0_i32 : i32
    %1 = arith.extui %0 : i1 to i32
    %c0_i32_0 = arith.constant 0 : i32
    %2 = arith.cmpi ne, %1, %c0_i32_0 : i32
    scf.if %2 {
      %cst_9 = arith.constant 0.000000e+00 : f32
      %12 = vector.broadcast %cst_9 : f32 to vector<128x128xf32>
      %c0_10 = arith.constant 0 : index
      %c0_11 = arith.constant 0 : index
      %13 = vector.load %arg7[%c0_10, %c0_11] : memref<128x128xf32, #tpu.memory_space<vmem>>, vector<128x128xf32>
      tpu.vector_store %arg7[%c0_10, %c0_11], %12 {strides = array<i32>} : memref<128x128xf32, #tpu.memory_space<vmem>>, vector<128x128xf32>,
    } else {
    }
    %c0 = arith.constant 0 : index
    %c0_1 = arith.constant 0 : index
    %3 = vector.load %arg7[%c0, %c0_1] : memref<128x128xf32, #tpu.memory_space<vmem>>, vector<128x128xf32>
    %c0_2 = arith.constant 0 : index
    %c0_3 = arith.constant 0 : index
    %4 = vector.load %arg2[%c0_2, %c0_3] : memref<128x128xf32, #tpu.memory_space<vmem>>, vector<128x128xf32>
    %c0_4 = arith.constant 0 : index
    %c0_5 = arith.constant 0 : index
    %5 = vector.load %arg3[%c0_4, %c0_5] : memref<128x128xf32, #tpu.memory_space<vmem>>, vector<128x128xf32>
    %cst = arith.constant dense<0.000000e+00> : vector<128x128xf32>
    %6 = tpu.matmul %4, %5, %cst {dimension_numbers = #tpu.dot_dimension_numbers<[1], [0], [0], [1], [0, 0, 1, 1], [], []>} : vector<128x128xf32>, vector<128x128xf32>, vector<128x128xf32> -> vector<128x128xf32>
    %7 = arith.addf %3, %6 : vector<128x128xf32>
    %c0_6 = arith.constant 0 : index
    %c0_7 = arith.constant 0 : index
    %8 = vector.load %arg7[%c0_6, %c0_7] : memref<128x128xf32, #tpu.memory_space<vmem>>, vector<128x128xf32>
    tpu.vector_store %arg7[%c0_6, %c0_7], %7 {strides = array<i32>} : memref<128x128xf32, #tpu.memory_space<vmem>>, vector<128x128xf32>,
    %c1_i32 = arith.constant 1 : i32
    %9 = arith.cmpi eq, %arg1, %c1_i32 : i32
    %10 = arith.extui %9 : i1 to i32
    %c0_i32_8 = arith.constant 0 : i32
    %11 = arith.cmpi ne, %10, %c0_i32_8 : i32
    scf.if %11 {
      %c0_9 = arith.constant 0 : index
      %c0_10 = arith.constant 0 : index
      %12 = vector.load %arg7[%c0_9, %c0_10] : memref<128x128xf32, #tpu.memory_space<vmem>>, vector<128x128xf32>
      %c0_11 = arith.constant 0 : index
      %c0_12 = arith.constant 0 : index
      %13 = vector.load %arg4[%c0_11, %c0_12] : memref<128x128xf32, #tpu.memory_space<vmem>>, vector<128x128xf32>
      %cst_13 = arith.constant 0.899999976 : f32
      %14 = vector.broadcast %cst_13 : f32 to vector<128x128xf32>
      %15 = arith.mulf %14, %12 : vector<128x128xf32>
      %cst_14 = arith.constant 1.000000e-01 : f32
      %16 = vector.broadcast %cst_14 : f32 to vector<128x128xf32>
      %17 = arith.mulf %16, %13 : vector<128x128xf32>
      %18 = arith.addf %15, %17 : vector<128x128xf32>
      %19 = arith.truncf %18 : vector<128x128xf32> to vector<128x128xbf16>
      %c0_15 = arith.constant 0 : index
      %c0_16 = arith.constant 0 : index
      %20 = vector.load %arg5[%c0_15, %c0_16] : memref<128x128xbf16, #tpu.memory_space<vmem>>, vector<128x128xbf16>
      %cst_17 = arith.constant dense<0.000000e+00> : vector<128x128xf32>
      %21 = tpu.matmul %19, %20, %cst_17 {dimension_numbers = #tpu.dot_dimension_numbers<[1], [0], [0], [1], [0, 0, 1, 1], [], []>} : vector<128x128xbf16>, vector<128x128xbf16>, vector<128x128xf32> -> vector<128x128xf32>
      %cst_18 = arith.constant 0.405465096 : f32
      %22 = vector.broadcast %cst_18 : f32 to vector<128x128xf32>
      %23 = arith.mulf %22, %21 : vector<128x128xf32>
      %cst_19 = arith.constant 0.594534874 : f32
      %24 = vector.broadcast %cst_19 : f32 to vector<128x128xf32>
      %25 = arith.mulf %24, %18 : vector<128x128xf32>
      %26 = arith.addf %23, %25 : vector<128x128xf32>
      %c0_20 = arith.constant 0 : index
      %c0_21 = arith.constant 0 : index
      %27 = vector.load %arg6[%c0_20, %c0_21] : memref<128x128xf32, #tpu.memory_space<vmem>>, vector<128x128xf32>
      tpu.vector_store %arg6[%c0_20, %c0_21], %26 {strides = array<i32>} : memref<128x128xf32, #tpu.memory_space<vmem>>, vector<128x128xf32>,
    } else {
    }
    return
  }
  func.func @transform_0(%arg0: i32, %arg1: i32) -> (i32, i32) {
    %c0_i32 = arith.constant 0 : i32
    return %arg0, %arg1 : i32, i32
  }
  func.func @transform_1(%arg0: i32, %arg1: i32) -> (i32, i32) {
    %c0_i32 = arith.constant 0 : i32
    %c0_i32_0 = arith.constant 0 : i32
    return %arg1, %c0_i32 : i32, i32
  }
  func.func @transform_2(%arg0: i32, %arg1: i32) -> (i32, i32) {
    %c0_i32 = arith.constant 0 : i32
    %c0_i32_0 = arith.constant 0 : i32
    return %arg0, %c0_i32 : i32, i32
  }
  func.func @transform_3(%arg0: i32, %arg1: i32) -> (i32, i32) {
    %c0_i32 = arith.constant 0 : i32
    %c0_i32_0 = arith.constant 0 : i32
    %c0_i32_1 = arith.constant 0 : i32
    return %c0_i32, %c0_i32_0 : i32, i32
  }
  func.func @transform_4(%arg0: i32, %arg1: i32) -> (i32, i32) {
    %c0_i32 = arith.constant 0 : i32
    %c0_i32_0 = arith.constant 0 : i32
    return %arg0, %c0_i32 : i32, i32
  }
}

</mosaic_0001>

<llo_original>
// kernel: tpu_custom_call.1
$region0: #{tpu_custom_call.1}
  #allocation0 [shape = 'u32[]', space=smem, size = 0x4, offset = 0x4, fixed_abs, tag = 'smem constant byte address 0x4 - core index']
  #allocation1 [shape = 'u32[144,128]{1,0:T(1,128)}', space=vmem, size = 0x12000, scoped, tag = 'internal scratch']
  #allocation2 [shape = 'f32[128,128]{1,0:T(8,128)}', space=vmem, size = 0x10000, scoped, tag = 'scratch operand']
  %s0 = inlined_call_operand.hbm [shape: f32[256,256], index: 0, kind: input, shape index: {}]
  %s1 = inlined_call_operand.hbm [shape: f32[256,128], index: 1, kind: input, shape index: {}]
  %s2 = inlined_call_operand.hbm [shape: f32[256,128], index: 2, kind: input, shape index: {}]
  %s3 = inlined_call_operand.hbm [shape: bf16[128,128], index: 3, kind: input, shape index: {}]
  %s4 = inlined_call_operand.hbm [shape: f32[256,128], index: 4, kind: output, shape index: {}]
  %s5 = sld [smem:[#allocation0]]
  $region73: #{tpu_custom_call.1} parent=0
    _
  %s7 = ssub.s32 1, %s5
  %s8 = scalar_select 0, %s7, %s5
  $region1: #{tpu_custom_call.1} parent=0
    #allocation3 [shape = 'u8[131072]{0}', space=vmem, size = 0x20000, scoped, tag = 'input window, operand 0']
    #allocation4 [shape = 's32[2]{0}', space=sflag, size = 0x8, scoped, tag = 'scoped memory for tpu_custom_call.1']
    #allocation5 [shape = 's32[2]{0}', space=sflag, size = 0x8, scoped, tag = 'scoped memory for tpu_custom_call.1']
    #allocation6 [shape = 'u8[131072]{0}', space=vmem, size = 0x20000, scoped, tag = 'input window, operand 1']
    #allocation7 [shape = 's32[2]{0}', space=sflag, size = 0x8, scoped, tag = 'scoped memory for tpu_custom_call.1']
    #allocation8 [shape = 'u8[131072]{0}', space=vmem, size = 0x20000, scoped, tag = 'input window, operand 2']
    #allocation9 [shape = 'u8[32768]{0}', space=vmem, size = 0x8000, scoped, tag = 'input window, operand 3, single buffered']
    #allocation10 [shape = 's32[1]{0}', space=sflag, size = 0x4, scoped, tag = 'scoped memory for tpu_custom_call.1']
    #allocation11 [shape = 'u8[131072]{0}', space=vmem, size = 0x20000, scoped, tag = 'output window, operand 0']
    %9 = vsyncpa [#allocation4], 0
    %s10 = scalar_lea.sflag [#allocation4], 1
    %11 = vsyncpa %s10, 0
    %12 = vsyncpa [#allocation7], 0
    %s13 = scalar_lea.sflag [#allocation7], 1
    %14 = vsyncpa %s13, 0
    %15 = vsyncpa [#allocation10], 0
    %16 = vsyncpa [#allocation5], 0
    %s17 = scalar_lea.sflag [#allocation5], 1
    %18 = vsyncpa %s17, 0
    loop: start=0, step=1, limit=6
    $region2: #{tpu_custom_call.1} parent=1 // loop_pre_header
      _
    $region3: #{tpu_custom_call.1} parent=1 // loop_header
      %s20 = sphi 0, %s24
      %p21 = scmp.ge.s32.totalorder %s20, 6
      %s27 = sphi 0, %s39
      %s28 = sphi 0, %s35
      %s29 = sphi 0, %s27
      %s30 = sphi 0, %s28
      %s31 = sphi 0, %s29
      %s32 = sphi 0, %s30
      %s44 = sphi 0, %s46
      %s47 = sphi 0, %s44
      %s48 = sphi 0, %s47
      %s64 = sphi 0, %s48
      %s70 = sphi 0, %s72
      %s73 = sphi 0, %s70
      %s74 = sphi 0, %s73
      %s90 = sphi 0, %s74
      %s96 = sphi 0, %s98
      %s99 = sphi 0, %s96
      %s100 = sphi 0, %s99
      %s116 = sphi 0, %s100
      %s120 = sphi 0, %s120
      %s122 = sphi 0, %s120
      %s123 = sphi 0, %s122
      %s137 = sphi 0, %s123
      %s143 = sphi 0, %s145
      %s146 = sphi 0, %s143
      %s147 = sphi 0, %s146
      %s163 = sphi 0, %s147
    $region4: #{tpu_custom_call.1} parent=1 // loop_header_branch
      %23 = sbr.rel (%p21) target = $region8
    $region5: #{tpu_custom_call.1} parent=1 // loop_body
      %s25 = ssub.s32 %s20, 1
      %s26 = ssub.s32 %s20, 2
      %s33 = sadd.s32 1, %s28
      %p34 = scmp.ge.s32.totalorder %s33, 2
      %s35 = scalar_select %p34, 0, %s33
      %s36 = sadd.s32 1, %s27
      %s37 = scalar_select %p34, %s36, %s27
      %p38 = scmp.ge.s32.totalorder %s37, 2
      %s39 = scalar_select %p38, 0, %s37
      %s40 = ssub.s32 %s27, %s39
      %s41 = ssub.s32 %s28, %s35
      %s42 = sor.u32 %s40, %s41
      %p43 = scmp.eq.s32.totalorder %s42, 0
      %s45 = sadd.s32 %s44, 1
      %s46 = scalar_select %p43, %s44, %s45
      %p49 = pneg %p43
      %p50 = scmp.eq.s32.totalorder %s20, 3
      %p51 = por %p49, %p50
      %p52 = scmp.ne.s32.totalorder %s44, %s47
      %p53 = scmp.eq.s32.totalorder %s20, 0
      %p54 = por %p52, %p53
      %p55 = scmp.ne.s32.totalorder %s44, %s47
      %p56 = scmp.eq.s32.totalorder %s25, 3
      %p57 = por %p55, %p56
      %p58 = scmp.ne.s32.totalorder %s47, %s48
      %p59 = scmp.eq.s32.totalorder %s25, 0
      %p60 = por %p58, %p59
      %p61 = scmp.ne.s32.totalorder %s47, %s48
      %p62 = scmp.eq.s32.totalorder %s26, 3
      %p63 = por %p61, %p62
      %p65 = scmp.ne.s32.totalorder %s48, %s64
      %p66 = scmp.eq.s32.totalorder %s26, 0
      %p67 = por %p65, %p66
      %s68 = ssub.s32 %s28, %s35
      %p69 = scmp.eq.s32.totalorder %s68, 0
      %s71 = sadd.s32 %s70, 1
      %s72 = scalar_select %p69, %s70, %s71
      %p75 = pneg %p69
      %p76 = scmp.eq.s32.totalorder %s20, 3
      %p77 = por %p75, %p76
      %p78 = scmp.ne.s32.totalorder %s70, %s73
      %p79 = scmp.eq.s32.totalorder %s20, 0
      %p80 = por %p78, %p79
      %p81 = scmp.ne.s32.totalorder %s70, %s73
      %p82 = scmp.eq.s32.totalorder %s25, 3
      %p83 = por %p81, %p82
      %p84 = scmp.ne.s32.totalorder %s73, %s74
      %p85 = scmp.eq.s32.totalorder %s25, 0
      %p86 = por %p84, %p85
      %p87 = scmp.ne.s32.totalorder %s73, %s74
      %p88 = scmp.eq.s32.totalorder %s26, 3
      %p89 = por %p87, %p88
      %p91 = scmp.ne.s32.totalorder %s74, %s90
      %p92 = scmp.eq.s32.totalorder %s26, 0
      %p93 = por %p91, %p92
      %s94 = ssub.s32 %s27, %s39
      %p95 = scmp.eq.s32.totalorder %s94, 0
      %s97 = sadd.s32 %s96, 1
      %s98 = scalar_select %p95, %s96, %s97
      %p101 = pneg %p95
      %p102 = scmp.eq.s32.totalorder %s20, 3
      %p103 = por %p101, %p102
      %p104 = scmp.ne.s32.totalorder %s96, %s99
      %p105 = scmp.eq.s32.totalorder %s20, 0
      %p106 = por %p104, %p105
      %p107 = scmp.ne.s32.totalorder %s96, %s99
      %p108 = scmp.eq.s32.totalorder %s25, 3
      %p109 = por %p107, %p108
      %p110 = scmp.ne.s32.totalorder %s99, %s100
      %p111 = scmp.eq.s32.totalorder %s25, 0
      %p112 = por %p110, %p111
      %p113 = scmp.ne.s32.totalorder %s99, %s100
      %p114 = scmp.eq.s32.totalorder %s26, 3
      %p115 = por %p113, %p114
      %p117 = scmp.ne.s32.totalorder %s100, %s116
      %p118 = scmp.eq.s32.totalorder %s26, 0
      %p119 = por %p117, %p118
      %s121 = sadd.s32 %s120, 1
      %p124 = scmp.eq.s32.totalorder %s20, 3
      %p125 = scmp.ne.s32.totalorder %s120, %s122
      %p126 = scmp.eq.s32.totalorder %s20, 0
      %p127 = por %p125, %p126
      %p128 = scmp.ne.s32.totalorder %s120, %s122
      %p129 = scmp.eq.s32.totalorder %s25, 3
      %p130 = por %p128, %p129
      %p131 = scmp.ne.s32.totalorder %s122, %s123
      %p132 = scmp.eq.s32.totalorder %s25, 0
      %p133 = por %p131, %p132
      %p134 = scmp.ne.s32.totalorder %s122, %s123
      %p135 = scmp.eq.s32.totalorder %s26, 3
      %p136 = por %p134, %p135
      %p138 = scmp.ne.s32.totalorder %s123, %s137
      %p139 = scmp.eq.s32.totalorder %s26, 0
      %p140 = por %p138, %p139
      %s141 = ssub.s32 %s27, %s39
      %p142 = scmp.eq.s32.totalorder %s141, 0
      %s144 = sadd.s32 %s143, 1
      %s145 = scalar_select %p142, %s143, %s144
      %p148 = pneg %p142
      %p149 = scmp.eq.s32.totalorder %s20, 3
      %p150 = por %p148, %p149
      %p151 = scmp.ne.s32.totalorder %s143, %s146
      %p152 = scmp.eq.s32.totalorder %s20, 0
      %p153 = por %p151, %p152
      %p154 = scmp.ne.s32.totalorder %s143, %s146
      %p155 = scmp.eq.s32.totalorder %s25, 3
      %p156 = por %p154, %p155
      %p157 = scmp.ne.s32.totalorder %s146, %s147
      %p158 = scmp.eq.s32.totalorder %s25, 0
      %p159 = por %p157, %p158
      %p160 = scmp.ne.s32.totalorder %s146, %s147
      %p161 = scmp.eq.s32.totalorder %s26, 3
      %p162 = por %p160, %p161
      %p164 = scmp.ne.s32.totalorder %s147, %s163
      %p165 = scmp.eq.s32.totalorder %s26, 0
      %p166 = por %p164, %p165
      %p167 = scmp.le.s32.totalorder 1, %s20
      %p168 = scmp.lt.s32.totalorder %s20, 5
      %p169 = pnand %p167, %p168
      %p170 = pneg %p169
      // Predicated region
      $region9: #{tpu_custom_call.1} parent=5 // pred_check
        _
      $region10: #{tpu_custom_call.1} parent=5 // pred_check_branch
        %172 = sbr.rel (%p169) target = $region12
      $region11: #{tpu_custom_call.1} parent=5 // pred_region
        %s173 = ssub.s32 %s20, 1
        // Predicated region
        $region13: #{tpu_custom_call.1} parent=11 // pred_check
          %p174 = pneg %p133
        $region14: #{tpu_custom_call.1} parent=11 // pred_check_branch
          %176 = sbr.rel (%p174) target = $region16
        $region15: #{tpu_custom_call.1} parent=11 // pred_region
          %s178 = ssub.s32 1024, 1024
          %179 = vsyncadd [#allocation10], %s178
          %s180 = sshll.u32 [#allocation9], 4
          %s181 = int_to_ptr.vmem [resolvable:$true] %s180
          %186 = dma.hbm_to_vmem [thread:$0]  %s3, 1024, %s181, [#allocation10], 64, 64, 4
        $region16: #{tpu_custom_call.1} parent=11 // pred_fallthru
          _
      $region12: #{tpu_custom_call.1} parent=5 // pred_fallthru
        _
      %p187 = scmp.lt.s32.totalorder %s20, 4
      // Predicated region
      $region17: #{tpu_custom_call.1} parent=5 // pred_check
        %p188 = pneg %p187
      $region18: #{tpu_custom_call.1} parent=5 // pred_check_branch
        %190 = sbr.rel (%p188) target = $region20
      $region19: #{tpu_custom_call.1} parent=5 // pred_region
        // Predicated region
        $region21: #{tpu_custom_call.1} parent=19 // pred_check
          %p191 = pneg %p54
        $region22: #{tpu_custom_call.1} parent=19 // pred_check_branch
          %193 = sbr.rel (%p191) target = $region24
        $region23: #{tpu_custom_call.1} parent=19 // pred_region
          %s194 = sand.u32 %s44, 1
          %s195 = scalar_lea.sflag [#allocation4], %s194
          %s196 = sand.u32 %s44, 1
          %s197 = smul.addr %s196, 128
          %s198 = scalar_lea.vmem [#allocation3], %s197
          %s199 = smul.u32 16, %s27
          %s201 = ssub.s32 2048, 2048
          %202 = vsyncadd %s195, %s201
          %s203 = smul.addr %s199, 2
          %s204 = sadd.s32 %s28, %s203
          %s205 = smul.addr %s204, 128
          %s206 = scalar_lea.hbm %s0, %s205
          %s207 = sshll.u32 %s198, 4
          %s208 = int_to_ptr.vmem [resolvable:$true] %s207
          %213 = dma.hbm_to_vmem [thread:$0]  %s206, 2048, %s208, %s195, 256, 128, 8
        $region24: #{tpu_custom_call.1} parent=19 // pred_fallthru
          _
        // Predicated region
        $region25: #{tpu_custom_call.1} parent=19 // pred_check
          %p214 = pneg %p80
        $region26: #{tpu_custom_call.1} parent=19 // pred_check_branch
          %216 = sbr.rel (%p214) target = $region28
        $region27: #{tpu_custom_call.1} parent=19 // pred_region
          %s217 = sand.u32 %s20, 1
          %s218 = scalar_lea.sflag [#allocation7], %s217
          %s219 = sand.u32 %s70, 1
          %s220 = smul.addr %s219, 128
          %s221 = scalar_lea.vmem [#allocation6], %s220
          %s222 = smul.u32 16, %s28
          %s224 = ssub.s32 2048, 2048
          %225 = vsyncadd %s218, %s224
          %s226 = smul.addr %s222, 128
          %s227 = scalar_lea.hbm %s1, %s226
          %s228 = sshll.u32 %s221, 4
          %s229 = int_to_ptr.vmem [resolvable:$true] %s228
          %234 = dma.hbm_to_vmem [thread:$0]  %s227, 2048, %s229, %s218, 128, 128, 8
        $region28: #{tpu_custom_call.1} parent=19 // pred_fallthru
          _
        // Predicated region
        $region29: #{tpu_custom_call.1} parent=19 // pred_check
          %p235 = pneg %p106
        $region30: #{tpu_custom_call.1} parent=19 // pred_check_branch
          %237 = sbr.rel (%p235) target = $region32
        $region31: #{tpu_custom_call.1} parent=19 // pred_region
          %s238 = sand.u32 %s20, 1
          %s239 = scalar_lea.sflag [#allocation7], %s238
          %s240 = sand.u32 %s96, 1
          %s241 = smul.addr %s240, 128
          %s242 = scalar_lea.vmem [#allocation8], %s241
          %s243 = smul.u32 16, %s27
          %s245 = ssub.s32 2048, 2048
          %246 = vsyncadd %s239, %s245
          %s247 = smul.addr %s243, 128
          %s248 = scalar_lea.hbm %s2, %s247
          %s249 = sshll.u32 %s242, 4
          %s250 = int_to_ptr.vmem [resolvable:$true] %s249
          %255 = dma.hbm_to_vmem [thread:$0]  %s248, 2048, %s250, %s239, 128, 128, 8
        $region32: #{tpu_custom_call.1} parent=19 // pred_fallthru
          _
      $region20: #{tpu_custom_call.1} parent=5 // pred_fallthru
        _
      %p256 = scmp.le.s32.totalorder 1, %s20
      %p257 = scmp.lt.s32.totalorder %s20, 5
      %p258 = pnand %p256, %p257
      %p259 = pneg %p258
      // Predicated region
      $region33: #{tpu_custom_call.1} parent=5 // pred_check
        _
      $region34: #{tpu_custom_call.1} parent=5 // pred_check_branch
        %261 = sbr.rel (%p258) target = $region36
      $region35: #{tpu_custom_call.1} parent=5 // pred_region
        %s262 = ssub.s32 %s20, 1
        %s263 = sand.u32 %s47, 1
        %s264 = scalar_lea.sflag [#allocation4], %s263
        %s265 = sand.u32 %s47, 1
        %s266 = smul.addr %s265, 128
        %s267 = scalar_lea.vmem [#allocation3], %s266
        // Predicated region
        $region37: #{tpu_custom_call.1} parent=35 // pred_check
          %p268 = pneg %p60
        $region38: #{tpu_custom_call.1} parent=35 // pred_check_branch
          %270 = sbr.rel (%p268) target = $region40
        $region39: #{tpu_custom_call.1} parent=35 // pred_region
          %271 = dma.done %s264, 2048
        $region40: #{tpu_custom_call.1} parent=35 // pred_fallthru
          _
        %s272 = sand.u32 %s25, 1
        %s273 = scalar_lea.sflag [#allocation7], %s272
        %s274 = sand.u32 %s73, 1
        %s275 = smul.addr %s274, 128
        %s276 = scalar_lea.vmem [#allocation6], %s275
        // Predicated region
        $region41: #{tpu_custom_call.1} parent=35 // pred_check
          %p277 = pneg %p86
        $region42: #{tpu_custom_call.1} parent=35 // pred_check_branch
          %279 = sbr.rel (%p277) target = $region44
        $region43: #{tpu_custom_call.1} parent=35 // pred_region
          %280 = dma.done %s273, 2048
        $region44: #{tpu_custom_call.1} parent=35 // pred_fallthru
          _
        %s281 = sand.u32 %s25, 1
        %s282 = scalar_lea.sflag [#allocation7], %s281
        %s283 = sand.u32 %s99, 1
        %s284 = smul.addr %s283, 128
        %s285 = scalar_lea.vmem [#allocation8], %s284
        // Predicated region
        $region45: #{tpu_custom_call.1} parent=35 // pred_check
          %p286 = pneg %p112
        $region46: #{tpu_custom_call.1} parent=35 // pred_check_branch
          %288 = sbr.rel (%p286) target = $region48
        $region47: #{tpu_custom_call.1} parent=35 // pred_region
          %289 = dma.done %s282, 2048
        $region48: #{tpu_custom_call.1} parent=35 // pred_fallthru
          _
        // Predicated region
        $region49: #{tpu_custom_call.1} parent=35 // pred_check
          %p290 = pneg %p133
        $region50: #{tpu_custom_call.1} parent=35 // pred_check_branch
          %292 = sbr.rel (%p290) target = $region52
        $region51: #{tpu_custom_call.1} parent=35 // pred_region
          %293 = dma.done [#allocation10], 1024
        $region52: #{tpu_custom_call.1} parent=35 // pred_fallthru
          _
        %s294 = sand.u32 %s47, 1
        %s295 = scalar_lea.sflag [#allocation4], %s294
        %s296 = sand.u32 %s47, 1
        %s297 = smul.addr %s296, 128
        %s298 = scalar_lea.vmem [#allocation3], %s297
        %p299 = pneg %p60
        %p300 = pneg %p57
        %s301 = sand.u32 %s25, 1
        %s302 = scalar_lea.sflag [#allocation7], %s301
        %s303 = sand.u32 %s73, 1
        %s304 = smul.addr %s303, 128
        %s305 = scalar_lea.vmem [#allocation6], %s304
        %p306 = pneg %p86
        %p307 = pneg %p83
        %s308 = sand.u32 %s25, 1
        %s309 = scalar_lea.sflag [#allocation7], %s308
        %s310 = sand.u32 %s99, 1
        %s311 = smul.addr %s310, 128
        %s312 = scalar_lea.vmem [#allocation8], %s311
        %p313 = pneg %p112
        %p314 = pneg %p109
        %p315 = pneg %p133
        %p316 = pneg %p130
        %p317 = pneg %p159
        %p318 = pneg %p156
        %s319 = sand.u32 %s146, 1
        %s320 = scalar_lea.sflag [#allocation5], %s319
        %s321 = sand.u32 %s146, 1
        %s322 = smul.addr %s321, 128
        %s323 = scalar_lea.vmem [#allocation11], %s322
        %s324 = smul.u32 16, %s29
        %s325 = smul.u32 16, %s30
        %s326 = smul.u32 16, %s29
        %s327 = smul.u32 16, %s29
        %p329 = scmp.eq.s32.totalorder %s30, 0
        // Predicated region
        $region53: #{tpu_custom_call.1} parent=35 // pred_check
          %p330 = pneg %p329
        $region54: #{tpu_custom_call.1} parent=35 // pred_check_branch
          %332 = sbr.rel (%p330) target = $region56
        $region55: #{tpu_custom_call.1} parent=35 // pred_region
          %333 = vst [vmem:[#allocation2] sm:$0xff] 0.0
          %334 = vst [vmem:[#allocation2 + $0x8] sm:$0xff] 0.0
          %335 = vst [vmem:[#allocation2 + $0x10] sm:$0xff] 0.0
          %336 = vst [vmem:[#allocation2 + $0x18] sm:$0xff] 0.0
          %337 = vst [vmem:[#allocation2 + $0x20] sm:$0xff] 0.0
          %338 = vst [vmem:[#allocation2 + $0x28] sm:$0xff] 0.0
          %339 = vst [vmem:[#allocation2 + $0x30] sm:$0xff] 0.0
          %340 = vst [vmem:[#allocation2 + $0x38] sm:$0xff] 0.0
          %341 = vst [vmem:[#allocation2 + $0x40] sm:$0xff] 0.0
          %342 = vst [vmem:[#allocation2 + $0x48] sm:$0xff] 0.0
          %343 = vst [vmem:[#allocation2 + $0x50] sm:$0xff] 0.0
          %344 = vst [vmem:[#allocation2 + $0x58] sm:$0xff] 0.0
          %345 = vst [vmem:[#allocation2 + $0x60] sm:$0xff] 0.0
          %346 = vst [vmem:[#allocation2 + $0x68] sm:$0xff] 0.0
          %347 = vst [vmem:[#allocation2 + $0x70] sm:$0xff] 0.0
          %348 = vst [vmem:[#allocation2 + $0x78] sm:$0xff] 0.0
        $region56: #{tpu_custom_call.1} parent=35 // pred_fallthru
          _
        %v349 = vld [vmem:[#allocation2] sm:$0xff]
        %v350 = vld [vmem:[#allocation2 + $0x8] sm:$0xff]
        %v351 = vld [vmem:[#allocation2 + $0x10] sm:$0xff]
        %v352 = vld [vmem:[#allocation2 + $0x18] sm:$0xff]
        %v353 = vld [vmem:[#allocation2 + $0x20] sm:$0xff]
        %v354 = vld [vmem:[#allocation2 + $0x28] sm:$0xff]
        %v355 = vld [vmem:[#allocation2 + $0x30] sm:$0xff]
        %v356 = vld [vmem:[#allocation2 + $0x38] sm:$0xff]
        %v357 = vld [vmem:[#allocation2 + $0x40] sm:$0xff]
        %v358 = vld [vmem:[#allocation2 + $0x48] sm:$0xff]
        %v359 = vld [vmem:[#allocation2 + $0x50] sm:$0xff]
        %v360 = vld [vmem:[#allocation2 + $0x58] sm:$0xff]
        %v361 = vld [vmem:[#allocation2 + $0x60] sm:$0xff]
        %v362 = vld [vmem:[#allocation2 + $0x68] sm:$0xff]
        %v363 = vld [vmem:[#allocation2 + $0x70] sm:$0xff]
        %v364 = vld [vmem:[#allocation2 + $0x78] sm:$0xff]
        %v365 = vld [vmem:[%s267] sm:$0xff]
        %v366 = vld [vmem:[%s267 + $0x8] sm:$0xff]
        %v367 = vld [vmem:[%s267 + $0x10] sm:$0xff]
        %v368 = vld [vmem:[%s267 + $0x18] sm:$0xff]
        %v369 = vld [vmem:[%s267 + $0x20] sm:$0xff]
        %v370 = vld [vmem:[%s267 + $0x28] sm:$0xff]
        %v371 = vld [vmem:[%s267 + $0x30] sm:$0xff]
        %v372 = vld [vmem:[%s267 + $0x38] sm:$0xff]
        %v373 = vld [vmem:[%s267 + $0x40] sm:$0xff]
        %v374 = vld [vmem:[%s267 + $0x48] sm:$0xff]
        %v375 = vld [vmem:[%s267 + $0x50] sm:$0xff]
        %v376 = vld [vmem:[%s267 + $0x58] sm:$0xff]
        %v377 = vld [vmem:[%s267 + $0x60] sm:$0xff]
        %v378 = vld [vmem:[%s267 + $0x68] sm:$0xff]
        %v379 = vld [vmem:[%s267 + $0x70] sm:$0xff]
        %v380 = vld [vmem:[%s267 + $0x78] sm:$0xff]
        %v381 = vld [vmem:[%s276] sm:$0xff]
        %v382 = vld [vmem:[%s276 + $0x8] sm:$0xff]
        %v383 = vld [vmem:[%s276 + $0x10] sm:$0xff]
        %v384 = vld [vmem:[%s276 + $0x18] sm:$0xff]
        %v385 = vld [vmem:[%s276 + $0x20] sm:$0xff]
        %v386 = vld [vmem:[%s276 + $0x28] sm:$0xff]
        %v387 = vld [vmem:[%s276 + $0x30] sm:$0xff]
        %v388 = vld [vmem:[%s276 + $0x38] sm:$0xff]
        %v389 = vld [vmem:[%s276 + $0x40] sm:$0xff]
        %v390 = vld [vmem:[%s276 + $0x48] sm:$0xff]
        %v391 = vld [vmem:[%s276 + $0x50] sm:$0xff]
        %v392 = vld [vmem:[%s276 + $0x58] sm:$0xff]
        %v393 = vld [vmem:[%s276 + $0x60] sm:$0xff]
        %v394 = vld [vmem:[%s276 + $0x68] sm:$0xff]
        %v395 = vld [vmem:[%s276 + $0x70] sm:$0xff]
        %v396 = vld [vmem:[%s276 + $0x78] sm:$0xff]
        %397 = vmatprep.subr.mxu0 0.0
        %398 = vmatpush1.msra.mxu0 %v396
        %399 = vmatprep.subr.mxu0 0.0
        %400 = vmatpush1.msra.mxu0 %v395
        %401 = vmatprep.subr.mxu0 0.0
        %402 = vmatpush1.msra.mxu0 %v394
        %403 = vmatprep.subr.mxu0 0.0
        %404 = vmatpush1.msra.mxu0 %v393
        %405 = vmatprep.subr.mxu0 0.0
        %406 = vmatpush1.msra.mxu0 %v392
        %407 = vmatprep.subr.mxu0 0.0
        %408 = vmatpush1.msra.mxu0 %v391
        %409 = vmatprep.subr.mxu0 0.0
        %410 = vmatpush1.msra.mxu0 %v390
        %411 = vmatprep.subr.mxu0 0.0
        %412 = vmatpush1.msra.mxu0 %v389
        %413 = vmatprep.subr.mxu0 0.0
        %414 = vmatpush1.msra.mxu0 %v388
        %415 = vmatprep.subr.mxu0 0.0
        %416 = vmatpush1.msra.mxu0 %v387
        %417 = vmatprep.subr.mxu0 0.0
        %418 = vmatpush1.msra.mxu0 %v386
        %419 = vmatprep.subr.mxu0 0.0
        %420 = vmatpush1.msra.mxu0 %v385
        %421 = vmatprep.subr.mxu0 0.0
        %422 = vmatpush1.msra.mxu0 %v384
        %423 = vmatprep.subr.mxu0 0.0
        %424 = vmatpush1.msra.mxu0 %v383
        %425 = vmatprep.subr.mxu0 0.0
        %426 = vmatpush1.msra.mxu0 %v382
        %427 = vmatprep.subr.mxu0 0.0
        %428 = vmatpush1.msra.mxu0 %v381
        %429 = vmatprep.subr.mxu0 0.0
        %430 = vmatpush2.msra.mxu0 0.0
        %431 = vmatprep.subr.mxu0 0.0
        %432 = vmatpush2.msra.mxu0 0.0
        %433 = vmatprep.subr.mxu0 0.0
        %434 = vmatpush2.msra.mxu0 0.0
        %435 = vmatprep.subr.mxu0 0.0
        %436 = vmatpush2.msra.mxu0 0.0
        %437 = vmatprep.subr.mxu0 0.0
        %438 = vmatpush2.msra.mxu0 0.0
        %439 = vmatprep.subr.mxu0 0.0
        %440 = vmatpush2.msra.mxu0 0.0
        %441 = vmatprep.subr.mxu0 0.0
        %442 = vmatpush2.msra.mxu0 0.0
        %443 = vmatprep.subr.mxu0 0.0
        %444 = vmatpush2.msra.mxu0 0.0
        %445 = vmatprep.subr.mxu0 0.0
        %446 = vmatpush2.msra.mxu0 0.0
        %447 = vmatprep.subr.mxu0 0.0
        %448 = vmatpush2.msra.mxu0 0.0
        %449 = vmatprep.subr.mxu0 0.0
        %450 = vmatpush2.msra.mxu0 0.0
        %451 = vmatprep.subr.mxu0 0.0
        %452 = vmatpush2.msra.mxu0 0.0
        %453 = vmatprep.subr.mxu0 0.0
        %454 = vmatpush2.msra.mxu0 0.0
        %455 = vmatprep.subr.mxu0 0.0
        %456 = vmatpush2.msra.mxu0 0.0
        %457 = vmatprep.subr.mxu0 0.0
        %458 = vmatpush2.msra.mxu0 0.0
        %459 = vmatprep.subr.mxu0 0.0
        %460 = vmatpush2.msra.mxu0 0.0
        %461 = vmatprep.mubr.f32.mxu0 0.0
        %462 = vmatmul.mubr.f32.gmra.mxu0 %v365
        %v463 = vpop.f32.mrf.mxu0
        %v464 = vadd.f32 0.0, %v463
        %v465 = vpop.f32.mrf.mxu0
        %466 = vmatprep.mubr.f32.mxu0 0.0
        %467 = vmatmul.mubr.f32.gmra.mxu0 %v366
        %v468 = vpop.f32.mrf.mxu0
        %v469 = vadd.f32 0.0, %v468
        %v470 = vpop.f32.mrf.mxu0
        %471 = vmatprep.mubr.f32.mxu0 0.0
        %472 = vmatmul.mubr.f32.gmra.mxu0 %v367
        %v473 = vpop.f32.mrf.mxu0
        %v474 = vadd.f32 0.0, %v473
        %v475 = vpop.f32.mrf.mxu0
        %476 = vmatprep.mubr.f32.mxu0 0.0
        %477 = vmatmul.mubr.f32.gmra.mxu0 %v368
        %v478 = vpop.f32.mrf.mxu0
        %v479 = vadd.f32 0.0, %v478
        %v480 = vpop.f32.mrf.mxu0
        %481 = vmatprep.mubr.f32.mxu0 0.0
        %482 = vmatmul.mubr.f32.gmra.mxu0 %v369
        %v483 = vpop.f32.mrf.mxu0
        %v484 = vadd.f32 0.0, %v483
        %v485 = vpop.f32.mrf.mxu0
        %486 = vmatprep.mubr.f32.mxu0 0.0
        %487 = vmatmul.mubr.f32.gmra.mxu0 %v370
        %v488 = vpop.f32.mrf.mxu0
        %v489 = vadd.f32 0.0, %v488
        %v490 = vpop.f32.mrf.mxu0
        %491 = vmatprep.mubr.f32.mxu0 0.0
        %492 = vmatmul.mubr.f32.gmra.mxu0 %v371
        %v493 = vpop.f32.mrf.mxu0
        %v494 = vadd.f32 0.0, %v493
        %v495 = vpop.f32.mrf.mxu0
        %496 = vmatprep.mubr.f32.mxu0 0.0
        %497 = vmatmul.mubr.f32.gmra.mxu0 %v372
        %v498 = vpop.f32.mrf.mxu0
        %v499 = vadd.f32 0.0, %v498
        %v500 = vpop.f32.mrf.mxu0
        %501 = vmatprep.mubr.f32.mxu0 0.0
        %502 = vmatmul.mubr.f32.gmra.mxu0 %v373
        %v503 = vpop.f32.mrf.mxu0
        %v504 = vadd.f32 0.0, %v503
        %v505 = vpop.f32.mrf.mxu0
        %506 = vmatprep.mubr.f32.mxu0 0.0
        %507 = vmatmul.mubr.f32.gmra.mxu0 %v374
        %v508 = vpop.f32.mrf.mxu0
        %v509 = vadd.f32 0.0, %v508
        %v510 = vpop.f32.mrf.mxu0
        %511 = vmatprep.mubr.f32.mxu0 0.0
        %512 = vmatmul.mubr.f32.gmra.mxu0 %v375
        %v513 = vpop.f32.mrf.mxu0
        %v514 = vadd.f32 0.0, %v513
        %v515 = vpop.f32.mrf.mxu0
        %516 = vmatprep.mubr.f32.mxu0 0.0
        %517 = vmatmul.mubr.f32.gmra.mxu0 %v376
        %v518 = vpop.f32.mrf.mxu0
        %v519 = vadd.f32 0.0, %v518
        %v520 = vpop.f32.mrf.mxu0
        %521 = vmatprep.mubr.f32.mxu0 0.0
        %522 = vmatmul.mubr.f32.gmra.mxu0 %v377
        %v523 = vpop.f32.mrf.mxu0
        %v524 = vadd.f32 0.0, %v523
        %v525 = vpop.f32.mrf.mxu0
        %526 = vmatprep.mubr.f32.mxu0 0.0
        %527 = vmatmul.mubr.f32.gmra.mxu0 %v378
        %v528 = vpop.f32.mrf.mxu0
        %v529 = vadd.f32 0.0, %v528
        %v530 = vpop.f32.mrf.mxu0
        %531 = vmatprep.mubr.f32.mxu0 0.0
        %532 = vmatmul.mubr.f32.gmra.mxu0 %v379
        %v533 = vpop.f32.mrf.mxu0
        %v534 = vadd.f32 0.0, %v533
        %v535 = vpop.f32.mrf.mxu0
        %536 = vmatprep.mubr.f32.mxu0 0.0
        %537 = vmatmul.mubr.f32.gmra.mxu0 %v380
        %v538 = vpop.f32.mrf.mxu0
        %v539 = vadd.f32 0.0, %v538
        %v540 = vpop.f32.mrf.mxu0
        %541 = vdwg.mxu0
        %v542 = vadd.f32 %v349, %v464
        %v543 = vadd.f32 %v350, %v469
        %v544 = vadd.f32 %v351, %v474
        %v545 = vadd.f32 %v352, %v479
        %v546 = vadd.f32 %v353, %v484
        %v547 = vadd.f32 %v354, %v489
        %v548 = vadd.f32 %v355, %v494
        %v549 = vadd.f32 %v356, %v499
        %v550 = vadd.f32 %v357, %v504
        %v551 = vadd.f32 %v358, %v509
        %v552 = vadd.f32 %v359, %v514
        %v553 = vadd.f32 %v360, %v519
        %v554 = vadd.f32 %v361, %v524
        %v555 = vadd.f32 %v362, %v529
        %v556 = vadd.f32 %v363, %v534
        %v557 = vadd.f32 %v364, %v539
        %558 = vst [vmem:[#allocation2] sm:$0xff] %v542
        %559 = vst [vmem:[#allocation2 + $0x8] sm:$0xff] %v543
        %560 = vst [vmem:[#allocation2 + $0x10] sm:$0xff] %v544
        %561 = vst [vmem:[#allocation2 + $0x18] sm:$0xff] %v545
        %562 = vst [vmem:[#allocation2 + $0x20] sm:$0xff] %v546
        %563 = vst [vmem:[#allocation2 + $0x28] sm:$0xff] %v547
        %564 = vst [vmem:[#allocation2 + $0x30] sm:$0xff] %v548
        %565 = vst [vmem:[#allocation2 + $0x38] sm:$0xff] %v549
        %566 = vst [vmem:[#allocation2 + $0x40] sm:$0xff] %v550
        %567 = vst [vmem:[#allocation2 + $0x48] sm:$0xff] %v551
        %568 = vst [vmem:[#allocation2 + $0x50] sm:$0xff] %v552
        %569 = vst [vmem:[#allocation2 + $0x58] sm:$0xff] %v553
        %570 = vst [vmem:[#allocation2 + $0x60] sm:$0xff] %v554
        %571 = vst [vmem:[#allocation2 + $0x68] sm:$0xff] %v555
        %572 = vst [vmem:[#allocation2 + $0x70] sm:$0xff] %v556
        %573 = vst [vmem:[#allocation2 + $0x78] sm:$0xff] %v557
        %p574 = scmp.eq.s32.totalorder %s30, 1
        // Predicated region
        $region57: #{tpu_custom_call.1} parent=35 // pred_check
          %p575 = pneg %p574
        $region58: #{tpu_custom_call.1} parent=35 // pred_check_branch
          %577 = sbr.rel (%p575) target = $region60
        $region59: #{tpu_custom_call.1} parent=35 // pred_region
          %v578 = vld [vmem:[#allocation2] sm:$0xff]
          %v579 = vld [vmem:[#allocation2 + $0x8] sm:$0xff]
          %v580 = vld [vmem:[#allocation2 + $0x10] sm:$0xff]
          %v581 = vld [vmem:[#allocation2 + $0x18] sm:$0xff]
          %v582 = vld [vmem:[#allocation2 + $0x20] sm:$0xff]
          %v583 = vld [vmem:[#allocation2 + $0x28] sm:$0xff]
          %v584 = vld [vmem:[#allocation2 + $0x30] sm:$0xff]
          %v585 = vld [vmem:[#allocation2 + $0x38] sm:$0xff]
          %v586 = vld [vmem:[#allocation2 + $0x40] sm:$0xff]
          %v587 = vld [vmem:[#allocation2 + $0x48] sm:$0xff]
          %v588 = vld [vmem:[#allocation2 + $0x50] sm:$0xff]
          %v589 = vld [vmem:[#allocation2 + $0x58] sm:$0xff]
          %v590 = vld [vmem:[#allocation2 + $0x60] sm:$0xff]
          %v591 = vld [vmem:[#allocation2 + $0x68] sm:$0xff]
          %v592 = vld [vmem:[#allocation2 + $0x70] sm:$0xff]
          %v593 = vld [vmem:[#allocation2 + $0x78] sm:$0xff]
          %v594 = vld [vmem:[%s285] sm:$0xff]
          %v595 = vld [vmem:[%s285 + $0x8] sm:$0xff]
          %v596 = vld [vmem:[%s285 + $0x10] sm:$0xff]
          %v597 = vld [vmem:[%s285 + $0x18] sm:$0xff]
          %v598 = vld [vmem:[%s285 + $0x20] sm:$0xff]
          %v599 = vld [vmem:[%s285 + $0x28] sm:$0xff]
          %v600 = vld [vmem:[%s285 + $0x30] sm:$0xff]
          %v601 = vld [vmem:[%s285 + $0x38] sm:$0xff]
          %v602 = vld [vmem:[%s285 + $0x40] sm:$0xff]
          %v603 = vld [vmem:[%s285 + $0x48] sm:$0xff]
          %v604 = vld [vmem:[%s285 + $0x50] sm:$0xff]
          %v605 = vld [vmem:[%s285 + $0x58] sm:$0xff]
          %v606 = vld [vmem:[%s285 + $0x60] sm:$0xff]
          %v607 = vld [vmem:[%s285 + $0x68] sm:$0xff]
          %v608 = vld [vmem:[%s285 + $0x70] sm:$0xff]
          %v609 = vld [vmem:[%s285 + $0x78] sm:$0xff]
          %v610 = vmul.f32 %v578, 0.9
          %v611 = vmul.f32 %v579, 0.9
          %v612 = vmul.f32 %v580, 0.9
          %v613 = vmul.f32 %v581, 0.9
          %v614 = vmul.f32 %v582, 0.9
          %v615 = vmul.f32 %v583, 0.9
          %v616 = vmul.f32 %v584, 0.9
          %v617 = vmul.f32 %v585, 0.9
          %v618 = vmul.f32 %v586, 0.9
          %v619 = vmul.f32 %v587, 0.9
          %v620 = vmul.f32 %v588, 0.9
          %v621 = vmul.f32 %v589, 0.9
          %v622 = vmul.f32 %v590, 0.9
          %v623 = vmul.f32 %v591, 0.9
          %v624 = vmul.f32 %v592, 0.9
          %v625 = vmul.f32 %v593, 0.9
          %v626 = vmul.f32 %v594, 0.1
          %v627 = vmul.f32 %v595, 0.1
          %v628 = vmul.f32 %v596, 0.1
          %v629 = vmul.f32 %v597, 0.1
          %v630 = vmul.f32 %v598, 0.1
          %v631 = vmul.f32 %v599, 0.1
          %v632 = vmul.f32 %v600, 0.1
          %v633 = vmul.f32 %v601, 0.1
          %v634 = vmul.f32 %v602, 0.1
          %v635 = vmul.f32 %v603, 0.1
          %v636 = vmul.f32 %v604, 0.1
          %v637 = vmul.f32 %v605, 0.1
          %v638 = vmul.f32 %v606, 0.1
          %v639 = vmul.f32 %v607, 0.1
          %v640 = vmul.f32 %v608, 0.1
          %v641 = vmul.f32 %v609, 0.1
          %v642 = vadd.f32 %v610, %v626
          %v643 = vadd.f32 %v611, %v627
          %v644 = vadd.f32 %v612, %v628
          %v645 = vadd.f32 %v613, %v629
          %v646 = vadd.f32 %v614, %v630
          %v647 = vadd.f32 %v615, %v631
          %v648 = vadd.f32 %v616, %v632
          %v649 = vadd.f32 %v617, %v633
          %v650 = vadd.f32 %v618, %v634
          %v651 = vadd.f32 %v619, %v635
          %v652 = vadd.f32 %v620, %v636
          %v653 = vadd.f32 %v621, %v637
          %v654 = vadd.f32 %v622, %v638
          %v655 = vadd.f32 %v623, %v639
          %v656 = vadd.f32 %v624, %v640
          %v657 = vadd.f32 %v625, %v641
          %v658 = vpack.c.bf16 %v643, %v642
          %v659 = vpack.c.bf16 %v645, %v644
          %v660 = vpack.c.bf16 %v647, %v646
          %v661 = vpack.c.bf16 %v649, %v648
          %v662 = vpack.c.bf16 %v651, %v650
          %v663 = vpack.c.bf16 %v653, %v652
          %v664 = vpack.c.bf16 %v655, %v654
          %v665 = vpack.c.bf16 %v657, %v656
          %v666 = vld [vmem:[#allocation9] sm:$0xf]
          %v667 = vld [vmem:[#allocation9 + $0x4] sm:$0xf]
          %v668 = vld [vmem:[#allocation9 + $0x8] sm:$0xf]
          %v669 = vld [vmem:[#allocation9 + $0xc] sm:$0xf]
          %v670 = vld [vmem:[#allocation9 + $0x10] sm:$0xf]
          %v671 = vld [vmem:[#allocation9 + $0x14] sm:$0xf]
          %v672 = vld [vmem:[#allocation9 + $0x18] sm:$0xf]
          %v673 = vld [vmem:[#allocation9 + $0x1c] sm:$0xf]
          %v674 = vld [vmem:[#allocation9 + $0x20] sm:$0xf]
          %v675 = vld [vmem:[#allocation9 + $0x24] sm:$0xf]
          %v676 = vld [vmem:[#allocation9 + $0x28] sm:$0xf]
          %v677 = vld [vmem:[#allocation9 + $0x2c] sm:$0xf]
          %v678 = vld [vmem:[#allocation9 + $0x30] sm:$0xf]
          %v679 = vld [vmem:[#allocation9 + $0x34] sm:$0xf]
          %v680 = vld [vmem:[#allocation9 + $0x38] sm:$0xf]
          %v681 = vld [vmem:[#allocation9 + $0x3c] sm:$0xf]
          %v698 = vunpack.c.l.b16 %v666
          %v699 = vunpack.c.l.b16 %v667
          %v700 = vunpack.c.l.b16 %v668
          %v701 = vunpack.c.l.b16 %v669
          %v702 = vunpack.c.l.b16 %v670
          %v703 = vunpack.c.l.b16 %v671
          %v704 = vunpack.c.l.b16 %v672
          %v705 = vunpack.c.l.b16 %v673
          %v706 = vunpack.c.l.b16 %v674
          %v707 = vunpack.c.l.b16 %v675
          %v708 = vunpack.c.l.b16 %v676
          %v709 = vunpack.c.l.b16 %v677
          %v710 = vunpack.c.l.b16 %v678
          %v711 = vunpack.c.l.b16 %v679
          %v712 = vunpack.c.l.b16 %v680
          %v713 = vunpack.c.l.b16 %v681
          %v714 = vpack.c.b16 %v699, %v698
          %v715 = vpack.c.b16 %v701, %v700
          %v716 = vpack.c.b16 %v703, %v702
          %v717 = vpack.c.b16 %v705, %v704
          %v718 = vpack.c.b16 %v707, %v706
          %v719 = vpack.c.b16 %v709, %v708
          %v720 = vpack.c.b16 %v711, %v710
          %v721 = vpack.c.b16 %v713, %v712
          %730 = vmatprep.subr.bf16.mxu0 0
          %731 = vmatpush1.bf16.msra.mxu0 %v721
          %732 = vmatprep.subr.bf16.mxu0 0
          %733 = vmatpush1.bf16.msra.mxu0 %v720
          %734 = vmatprep.subr.bf16.mxu0 0
          %735 = vmatpush1.bf16.msra.mxu0 %v719
          %736 = vmatprep.subr.bf16.mxu0 0
          %737 = vmatpush1.bf16.msra.mxu0 %v718
          %738 = vmatprep.subr.bf16.mxu0 0
          %739 = vmatpush1.bf16.msra.mxu0 %v717
          %740 = vmatprep.subr.bf16.mxu0 0
          %741 = vmatpush1.bf16.msra.mxu0 %v716
          %742 = vmatprep.subr.bf16.mxu0 0
          %743 = vmatpush1.bf16.msra.mxu0 %v715
          %744 = vmatprep.subr.bf16.mxu0 0
          %745 = vmatpush1.bf16.msra.mxu0 %v714
          %746 = vmatprep.subr.bf16.mxu0 0
          %747 = vmatpush2.bf16.msra.mxu0 0
          %748 = vmatprep.subr.bf16.mxu0 0
          %749 = vmatpush2.bf16.msra.mxu0 0
          %750 = vmatprep.subr.bf16.mxu0 0
          %751 = vmatpush2.bf16.msra.mxu0 0
          %752 = vmatprep.subr.bf16.mxu0 0
          %753 = vmatpush2.bf16.msra.mxu0 0
          %754 = vmatprep.subr.bf16.mxu0 0
          %755 = vmatpush2.bf16.msra.mxu0 0
          %756 = vmatprep.subr.bf16.mxu0 0
          %757 = vmatpush2.bf16.msra.mxu0 0
          %758 = vmatprep.subr.bf16.mxu0 0
          %759 = vmatpush2.bf16.msra.mxu0 0
          %760 = vmatprep.subr.bf16.mxu0 0
          %761 = vmatpush2.bf16.msra.mxu0 0
          %762 = vmatprep.mubr.bf16.mxu0 0
          %763 = vmatmul.mubr.bf16.gmra.mxu0 %v658
          %v764 = vpop.f32.mrf.mxu0
          %v765 = vadd.f32 0.0, %v764
          %v766 = vpop.f32.mrf.mxu0
          %v767 = vpop.f32.mrf.mxu0
          %v768 = vadd.f32 0.0, %v767
          %v769 = vpop.f32.mrf.mxu0
          %770 = vmatprep.mubr.bf16.mxu0 0
          %771 = vmatmul.mubr.bf16.gmra.mxu0 %v659
          %v772 = vpop.f32.mrf.mxu0
          %v773 = vadd.f32 0.0, %v772
          %v774 = vpop.f32.mrf.mxu0
          %v775 = vpop.f32.mrf.mxu0
          %v776 = vadd.f32 0.0, %v775
          %v777 = vpop.f32.mrf.mxu0
          %778 = vmatprep.mubr.bf16.mxu0 0
          %779 = vmatmul.mubr.bf16.gmra.mxu0 %v660
          %v780 = vpop.f32.mrf.mxu0
          %v781 = vadd.f32 0.0, %v780
          %v782 = vpop.f32.mrf.mxu0
          %v783 = vpop.f32.mrf.mxu0
          %v784 = vadd.f32 0.0, %v783
          %v785 = vpop.f32.mrf.mxu0
          %786 = vmatprep.mubr.bf16.mxu0 0
          %787 = vmatmul.mubr.bf16.gmra.mxu0 %v661
          %v788 = vpop.f32.mrf.mxu0
          %v789 = vadd.f32 0.0, %v788
          %v790 = vpop.f32.mrf.mxu0
          %v791 = vpop.f32.mrf.mxu0
          %v792 = vadd.f32 0.0, %v791
          %v793 = vpop.f32.mrf.mxu0
          %794 = vmatprep.mubr.bf16.mxu0 0
          %795 = vmatmul.mubr.bf16.gmra.mxu0 %v662
          %v796 = vpop.f32.mrf.mxu0
          %v797 = vadd.f32 0.0, %v796
          %v798 = vpop.f32.mrf.mxu0
          %v799 = vpop.f32.mrf.mxu0
          %v800 = vadd.f32 0.0, %v799
          %v801 = vpop.f32.mrf.mxu0
          %802 = vmatprep.mubr.bf16.mxu0 0
          %803 = vmatmul.mubr.bf16.gmra.mxu0 %v663
          %v804 = vpop.f32.mrf.mxu0
          %v805 = vadd.f32 0.0, %v804
          %v806 = vpop.f32.mrf.mxu0
          %v807 = vpop.f32.mrf.mxu0
          %v808 = vadd.f32 0.0, %v807
          %v809 = vpop.f32.mrf.mxu0
          %810 = vmatprep.mubr.bf16.mxu0 0
          %811 = vmatmul.mubr.bf16.gmra.mxu0 %v664
          %v812 = vpop.f32.mrf.mxu0
          %v813 = vadd.f32 0.0, %v812
          %v814 = vpop.f32.mrf.mxu0
          %v815 = vpop.f32.mrf.mxu0
          %v816 = vadd.f32 0.0, %v815
          %v817 = vpop.f32.mrf.mxu0
          %818 = vmatprep.mubr.bf16.mxu0 0
          %819 = vmatmul.mubr.bf16.gmra.mxu0 %v665
          %v820 = vpop.f32.mrf.mxu0
          %v821 = vadd.f32 0.0, %v820
          %v822 = vpop.f32.mrf.mxu0
          %v823 = vpop.f32.mrf.mxu0
          %v824 = vadd.f32 0.0, %v823
          %v825 = vpop.f32.mrf.mxu0
          %826 = vdwg.mxu0
          %v827 = vmul.f32 %v765, 0.4054651
          %v828 = vmul.f32 %v768, 0.4054651
          %v829 = vmul.f32 %v773, 0.4054651
          %v830 = vmul.f32 %v776, 0.4054651
          %v831 = vmul.f32 %v781, 0.4054651
          %v832 = vmul.f32 %v784, 0.4054651
          %v833 = vmul.f32 %v789, 0.4054651
          %v834 = vmul.f32 %v792, 0.4054651
          %v835 = vmul.f32 %v797, 0.4054651
          %v836 = vmul.f32 %v800, 0.4054651
          %v837 = vmul.f32 %v805, 0.4054651
          %v838 = vmul.f32 %v808, 0.4054651
          %v839 = vmul.f32 %v813, 0.4054651
          %v840 = vmul.f32 %v816, 0.4054651
          %v841 = vmul.f32 %v821, 0.4054651
          %v842 = vmul.f32 %v824, 0.4054651
          %v843 = vmul.f32 %v642, 0.5945349
          %v844 = vmul.f32 %v643, 0.5945349
          %v845 = vmul.f32 %v644, 0.5945349
          %v846 = vmul.f32 %v645, 0.5945349
          %v847 = vmul.f32 %v646, 0.5945349
          %v848 = vmul.f32 %v647, 0.5945349
          %v849 = vmul.f32 %v648, 0.5945349
          %v850 = vmul.f32 %v649, 0.5945349
          %v851 = vmul.f32 %v650, 0.5945349
          %v852 = vmul.f32 %v651, 0.5945349
          %v853 = vmul.f32 %v652, 0.5945349
          %v854 = vmul.f32 %v653, 0.5945349
          %v855 = vmul.f32 %v654, 0.5945349
          %v856 = vmul.f32 %v655, 0.5945349
          %v857 = vmul.f32 %v656, 0.5945349
          %v858 = vmul.f32 %v657, 0.5945349
          %v859 = vadd.f32 %v827, %v843
          %v860 = vadd.f32 %v828, %v844
          %v861 = vadd.f32 %v829, %v845
          %v862 = vadd.f32 %v830, %v846
          %v863 = vadd.f32 %v831, %v847
          %v864 = vadd.f32 %v832, %v848
          %v865 = vadd.f32 %v833, %v849
          %v866 = vadd.f32 %v834, %v850
          %v867 = vadd.f32 %v835, %v851
          %v868 = vadd.f32 %v836, %v852
          %v869 = vadd.f32 %v837, %v853
          %v870 = vadd.f32 %v838, %v854
          %v871 = vadd.f32 %v839, %v855
          %v872 = vadd.f32 %v840, %v856
          %v873 = vadd.f32 %v841, %v857
          %v874 = vadd.f32 %v842, %v858
          %875 = vst [vmem:[%s323] sm:$0xff] %v859
          %876 = vst [vmem:[%s323 + $0x8] sm:$0xff] %v860
          %877 = vst [vmem:[%s323 + $0x10] sm:$0xff] %v861
          %878 = vst [vmem:[%s323 + $0x18] sm:$0xff] %v862
          %879 = vst [vmem:[%s323 + $0x20] sm:$0xff] %v863
          %880 = vst [vmem:[%s323 + $0x28] sm:$0xff] %v864
          %881 = vst [vmem:[%s323 + $0x30] sm:$0xff] %v865
          %882 = vst [vmem:[%s323 + $0x38] sm:$0xff] %v866
          %883 = vst [vmem:[%s323 + $0x40] sm:$0xff] %v867
          %884 = vst [vmem:[%s323 + $0x48] sm:$0xff] %v868
          %885 = vst [vmem:[%s323 + $0x50] sm:$0xff] %v869
          %886 = vst [vmem:[%s323 + $0x58] sm:$0xff] %v870
          %887 = vst [vmem:[%s323 + $0x60] sm:$0xff] %v871
          %888 = vst [vmem:[%s323 + $0x68] sm:$0xff] %v872
          %889 = vst [vmem:[%s323 + $0x70] sm:$0xff] %v873
          %890 = vst [vmem:[%s323 + $0x78] sm:$0xff] %v874
        $region60: #{tpu_custom_call.1} parent=35 // pred_fallthru
          _
        %s891 = sand.u32 %s146, 1
        %s892 = scalar_lea.sflag [#allocation5], %s891
        %s893 = sand.u32 %s146, 1
        %s894 = smul.addr %s893, 128
        %s895 = scalar_lea.vmem [#allocation11], %s894
        // Predicated region
        $region61: #{tpu_custom_call.1} parent=35 // pred_check
          %p896 = pneg %p156
        $region62: #{tpu_custom_call.1} parent=35 // pred_check_branch
          %898 = sbr.rel (%p896) target = $region64
        $region63: #{tpu_custom_call.1} parent=35 // pred_region
          %s899 = smul.u32 16, %s29
          %s901 = ssub.s32 2048, 2048
          %902 = vsyncadd %s892, %s901
          %s903 = smul.addr %s899, 128
          %s904 = scalar_lea.hbm %s4, %s903
          %s905 = sshll.u32 %s895, 4
          %s906 = int_to_ptr.vmem [resolvable:$true] %s905
          %911 = dma.vmem_to_hbm [thread:$0]  %s906, 2048, %s904, %s892, 128, 128, 8
        $region64: #{tpu_custom_call.1} parent=35 // pred_fallthru
          _
      $region36: #{tpu_custom_call.1} parent=5 // pred_fallthru
        _
      %p912 = scmp.le.s32.totalorder 2, %s20
      // Predicated region
      $region65: #{tpu_custom_call.1} parent=5 // pred_check
        %p913 = pneg %p912
      $region66: #{tpu_custom_call.1} parent=5 // pred_check_branch
        %915 = sbr.rel (%p913) target = $region68
      $region67: #{tpu_custom_call.1} parent=5 // pred_region
        %s916 = ssub.s32 %s20, 2
        // Predicated region
        $region69: #{tpu_custom_call.1} parent=67 // pred_check
          %p917 = pneg %p162
        $region70: #{tpu_custom_call.1} parent=67 // pred_check_branch
          %919 = sbr.rel (%p917) target = $region72
        $region71: #{tpu_custom_call.1} parent=67 // pred_region
          %s920 = sand.u32 %s147, 1
          %s921 = scalar_lea.sflag [#allocation5], %s920
          %s922 = sand.u32 %s147, 1
          %s923 = smul.addr %s922, 128
          %s924 = scalar_lea.vmem [#allocation11], %s923
          %925 = dma.done %s921, 2048
        $region72: #{tpu_custom_call.1} parent=67 // pred_fallthru
          _
      $region68: #{tpu_custom_call.1} parent=5 // pred_fallthru
        _
    $region6: #{tpu_custom_call.1} parent=1 // loop_footer
      %s24 = sadd.s32 1, %s20
    $region7: #{tpu_custom_call.1} parent=1 // loop_footer_branch
      %19 = sbr.rel target = $region3
    $region8: #{tpu_custom_call.1} parent=1 // loop_exit
      _
    %926 = vsyncpa [#allocation4], 1
    %s927 = scalar_lea.sflag [#allocation4], 1
    %928 = vsyncpa %s927, 1
    %929 = vsyncpa [#allocation7], 1
    %s930 = scalar_lea.sflag [#allocation7], 1
    %931 = vsyncpa %s930, 1
    %932 = vsyncpa [#allocation10], 1
    %933 = vsyncpa [#allocation5], 1
    %s934 = scalar_lea.sflag [#allocation5], 1
    %935 = vsyncpa %s934, 1

</llo_original>
